<compile_context>
chip_gen: v6e
topology: v6e:2x2x1
jax: 0.10.0
libtpu: 0.0.40
codegen_flags: <defaults>
</compile_context>

<pallas_src>
import jax
import jax.numpy as jnp
from jax.experimental import pallas as pl
from jax.experimental.pallas import tpu as pltpu


def _round_up(x, m):
    return (x + m - 1) // m * m


def _make_kernel(B, offsets, L_pad):
    def kernel(x_ref, w_ref, shift_ref, o_ref):
        # x_ref:     (B, C_in, S_pad)   zero-padded, spatially flattened, pre-ReLU
        # w_ref:     (C_out, K*K*C_in)  fused dw * pw * bn_scale weights
        # shift_ref: (C_out, 1)         folded BN shift
        # o_ref:     (B, C_out, L_pad)  stride-1 dense output (padded-width layout)
        w = w_ref[...]
        shift = shift_ref[...]
        x = jnp.maximum(x_ref[...], 0.0)                 # ReLU, lane-dense on VPU
        for b in range(B):                               # static unroll, B small
            xb = x[b]                                    # (C_in, S_pad)
            # im2col by static lane shifts; stack taps on the contraction axis.
            patches = jnp.concatenate(
                [xb[:, off:off + L_pad] for off in offsets], axis=0)
            # Fused depthwise + pointwise + BN-scale: one MXU matmul,
            # contraction over K*K*C_in.
            y = jnp.dot(w, patches, preferred_element_type=jnp.float32)
            o_ref[b] = y + shift                         # BN shift only
    return kernel


def dilconv_forward(x_nchw, dw_w, pw_w, gamma, beta, run_mean, run_var,
                    *, stride, padding, dilation, eps=1e-5):
    """DilConv forward (inference-mode BN). x_nchw: (N, C_in, H, W) float32."""
    N, C_in, H, W = x_nchw.shape
    C_out = pw_w.shape[0]
    K = dw_w.shape[-1]
    assert dw_w.shape[0] == C_in, "depth multiplier > 1 not supported"
    d = dilation
    Hp, Wp = H + 2 * padding, W + 2 * padding
    span = d * (K - 1)
    Ho1 = Hp - span                                  # stride-1 dense output height
    Ho = (Hp - span - 1) // stride + 1
    Wo = (Wp - span - 1) // stride + 1

    L = Ho1 * Wp                                     # dense output length (row-major)
    L_pad = _round_up(L, 128)                        # lane-dense output width
    max_off = span * Wp + span                       # largest tap offset
    S_pad = _round_up(max_off + L_pad, 128)          # flattened input length

    # Pad spatially, flatten H*W onto the lane axis. NCHW preserved: no transposes.
    x = x_nchw.astype(jnp.float32)
    x = jnp.pad(x, ((0, 0), (0, 0), (padding, padding), (padding, padding)))
    x = x.reshape(N, C_in, Hp * Wp)
    x = jnp.pad(x, ((0, 0), (0, 0), (0, S_pad - Hp * Wp)))

    # Fused weight: depthwise * pointwise * BN-scale -> (C_out, K*K*C_in).
    dw_t = jnp.transpose(dw_w[:, 0].astype(jnp.float32), (1, 2, 0))   # (K,K,C_in)
    dw_t = dw_t.reshape(K * K, C_in)                                  # tap-major
    pw2 = pw_w[:, :, 0, 0].astype(jnp.float32)                        # (C_out,C_in)
    inv_std = (gamma / jnp.sqrt(run_var + eps)).astype(jnp.float32)
    w_fused = inv_std[:, None, None] * pw2[:, None, :] * dw_t[None, :, :]
    w_fused = w_fused.reshape(C_out, K * K * C_in)
    shift = (beta - run_mean * inv_std).astype(jnp.float32).reshape(C_out, 1)

    # Tap offsets in the flattened (row-major) padded image; order matches dw_t.
    offsets = tuple(kh * d * Wp + kw * d for kh in range(K) for kw in range(K))

    # Batch several images per grid step (amortize ~0.35 us/step overhead).
    B = 1
    for cand in range(min(N, 8), 0, -1):
        if N % cand == 0:
            B = cand
            break

    kernel = _make_kernel(B, offsets, L_pad)

    y = pl.pallas_call(
        kernel,
        out_shape=jax.ShapeDtypeStruct((N, C_out, L_pad), jnp.float32),
        grid=(N // B,),
        in_specs=[
            pl.BlockSpec((B, C_in, S_pad), lambda n: (n, 0, 0)),
            pl.BlockSpec((C_out, K * K * C_in), lambda n: (0, 0)),
            pl.BlockSpec((C_out, 1), lambda n: (0, 0)),
        ],
        out_specs=pl.BlockSpec((B, C_out, L_pad), lambda n: (n, 0, 0)),
        compiler_params=pltpu.CompilerParams(
            dimension_semantics=("parallel",)),
    )(x, w_fused, shift)

    # Crop the padded-width dense output and apply the stride (tiny wrapper op).
    y = y[:, :, :L].reshape(N, C_out, Ho1, Wp)
    y = y[:, :, ::stride, ::stride][:, :, :Ho, :Wo]
    return y


def dilconv_reference(x, dw_w, pw_w, gamma, beta, run_mean, run_var,
                      *, stride, padding, dilation, eps=1e-5):
    C_in = x.shape[1]
    xr = jnp.maximum(x, 0.0)
    y = jax.lax.conv_general_dilated(
        xr, dw_w, window_strides=(stride, stride),
        padding=[(padding, padding), (padding, padding)],
        rhs_dilation=(dilation, dilation),
        dimension_numbers=("NCHW", "OIHW", "NCHW"),
        feature_group_count=C_in,
        precision=jax.lax.Precision.HIGHEST)
    y = jax.lax.conv_general_dilated(
        y, pw_w, window_strides=(1, 1), padding=[(0, 0), (0, 0)],
        dimension_numbers=("NCHW", "OIHW", "NCHW"),
        precision=jax.lax.Precision.HIGHEST)
    s = gamma / jnp.sqrt(run_var + eps)
    return y * s[None, :, None, None] + (beta - run_mean * s)[None, :, None, None]


if __name__ == "__main__":
    # Small DARTS-like config: dil_conv_3x3, stride 1, pad 2, dilation 2.
    N, C_in, H, W = 2, 8, 16, 16
    C_out, K, stride, padding, dilation = 16, 3, 1, 2, 2

    key = jax.random.PRNGKey(0)
    k1, k2, k3, k4, k5 = jax.random.split(key, 5)

    x = jax.random.normal(k1, (N, C_in, H, W), jnp.float32)
    # Depthwise conv weight (groups=C_in): (C_in, 1, K, K)
    dw_w = jax.random.normal(k2, (C_in, 1, K, K), jnp.float32) * 0.2
    # Pointwise conv weight: (C_out, C_in, 1, 1)
    pw_w = jax.random.normal(k3, (C_out, C_in, 1, 1), jnp.float32) * 0.2
    # BatchNorm (affine=True) params + running stats (inference mode).
    gamma = 1.0 + 0.1 * jax.random.normal(k4, (C_out,), jnp.float32)
    beta = 0.1 * jax.random.normal(k5, (C_out,), jnp.float32)
    run_mean = jnp.zeros((C_out,), jnp.float32)
    run_var = jnp.ones((C_out,), jnp.float32)

    out = dilconv_forward(x, dw_w, pw_w, gamma, beta, run_mean, run_var,
                          stride=stride, padding=padding, dilation=dilation)
    out = jax.block_until_ready(out)

    ref = dilconv_reference(x, dw_w, pw_w, gamma, beta, run_mean, run_var,
                            stride=stride, padding=padding, dilation=dilation)
    assert out.shape == ref.shape == (N, C_out, H, W)
    max_err = float(jnp.max(jnp.abs(out - ref)))
    assert max_err < 1e-3, f"mismatch vs reference: {max_err}"

    print("KERNEL_OK")
</pallas_src>

<mosaic_0001>
module attributes {stable_mosaic.version = 11 : i64} {
  func.func @kernel(%arg0: i32, %arg1: memref<2x8x512xf32, #tpu.memory_space<vmem>>, %arg2: memref<16x72xf32, #tpu.memory_space<vmem>>, %arg3: memref<16x1xf32, #tpu.memory_space<vmem>>, %arg4: memref<2x16x384xf32, #tpu.memory_space<vmem>>) attributes {dimension_semantics = [#tpu.dimension_semantics<parallel>], iteration_bounds = array<i64: 1>, scalar_prefetch = 0 : i64, scratch_operands = 0 : i64, tpu.core_type = #tpu.core_type<tc>, window_params = [{transform_indices = @transform_0, window_bounds = array<i64: 2, 8, 512>}, {pipeline_mode = #tpu.pipeline_mode<synchronous>, transform_indices = @transform_1, window_bounds = array<i64: 16, 72>}, {pipeline_mode = #tpu.pipeline_mode<synchronous>, transform_indices = @transform_2, window_bounds = array<i64: 16, 1>}, {transform_indices = @transform_3, window_bounds = array<i64: 2, 16, 384>}]} {
    %c0 = arith.constant 0 : index
    %c0_0 = arith.constant 0 : index
    %0 = vector.load %arg2[%c0, %c0_0] : memref<16x72xf32, #tpu.memory_space<vmem>>, vector<16x72xf32>
    %c0_1 = arith.constant 0 : index
    %c0_2 = arith.constant 0 : index
    %1 = vector.load %arg3[%c0_1, %c0_2] : memref<16x1xf32, #tpu.memory_space<vmem>>, vector<16x1xf32>
    %c0_3 = arith.constant 0 : index
    %c0_4 = arith.constant 0 : index
    %c0_5 = arith.constant 0 : index
    %2 = vector.load %arg1[%c0_3, %c0_4, %c0_5] : memref<2x8x512xf32, #tpu.memory_space<vmem>>, vector<2x8x512xf32>
    %cst = arith.constant 0.000000e+00 : f32
    %3 = vector.broadcast %cst : f32 to vector<2x8x512xf32>
    %4 = arith.maximumf %2, %3 : vector<2x8x512xf32>
    %5 = vector.extract_strided_slice %4 {offsets = [0, 0, 0], sizes = [1, 8, 512], strides = [1, 1, 1]} : vector<2x8x512xf32> to vector<1x8x512xf32>
    %6 = vector.shape_cast %5 : vector<1x8x512xf32> to vector<8x512xf32>
    %7 = vector.extract_strided_slice %6 {offsets = [0, 0], sizes = [8, 384], strides = [1, 1]} : vector<8x512xf32> to vector<8x384xf32>
    %8 = vector.extract_strided_slice %6 {offsets = [0, 2], sizes = [8, 384], strides = [1, 1]} : vector<8x512xf32> to vector<8x384xf32>
    %9 = vector.extract_strided_slice %6 {offsets = [0, 4], sizes = [8, 384], strides = [1, 1]} : vector<8x512xf32> to vector<8x384xf32>
    %10 = vector.extract_strided_slice %6 {offsets = [0, 40], sizes = [8, 384], strides = [1, 1]} : vector<8x512xf32> to vector<8x384xf32>
    %11 = vector.extract_strided_slice %6 {offsets = [0, 42], sizes = [8, 384], strides = [1, 1]} : vector<8x512xf32> to vector<8x384xf32>
    %12 = vector.extract_strided_slice %6 {offsets = [0, 44], sizes = [8, 384], strides = [1, 1]} : vector<8x512xf32> to vector<8x384xf32>
    %13 = vector.extract_strided_slice %6 {offsets = [0, 80], sizes = [8, 384], strides = [1, 1]} : vector<8x512xf32> to vector<8x384xf32>
    %14 = vector.extract_strided_slice %6 {offsets = [0, 82], sizes = [8, 384], strides = [1, 1]} : vector<8x512xf32> to vector<8x384xf32>
    %15 = vector.extract_strided_slice %6 {offsets = [0, 84], sizes = [8, 384], strides = [1, 1]} : vector<8x512xf32> to vector<8x384xf32>
    %16 = tpu.concatenate %7, %8, %9, %10, %11, %12, %13, %14, %15 in 0 : vector<8x384xf32>, vector<8x384xf32>, vector<8x384xf32>, vector<8x384xf32>, vector<8x384xf32>, vector<8x384xf32>, vector<8x384xf32>, vector<8x384xf32>, vector<8x384xf32> -> vector<72x384xf32>
    %cst_6 = arith.constant dense<0.000000e+00> : vector<16x384xf32>
    %17 = tpu.matmul %0, %16, %cst_6 {dimension_numbers = #tpu.dot_dimension_numbers<[1], [0], [0], [1], [0, 0, 1, 1], [], []>} : vector<16x72xf32>, vector<72x384xf32>, vector<16x384xf32> -> vector<16x384xf32>
    %18 = vector.broadcast %1 : vector<16x1xf32> to vector<16x384xf32>
    %19 = arith.addf %17, %18 : vector<16x384xf32>
    %c0_7 = arith.constant 0 : index
    %c0_8 = arith.constant 0 : index
    %c0_9 = arith.constant 0 : index
    %20 = vector.load %arg4[%c0_7, %c0_8, %c0_9] : memref<2x16x384xf32, #tpu.memory_space<vmem>>, vector<1x16x384xf32>
    %21 = vector.shape_cast %20 : vector<1x16x384xf32> to vector<16x384xf32>
    %22 = vector.shape_cast %19 : vector<16x384xf32> to vector<1x16x384xf32>
    tpu.vector_store %arg4[%c0_7, %c0_8, %c0_9], %22 {strides = array<i32>} : memref<2x16x384xf32, #tpu.memory_space<vmem>>, vector<1x16x384xf32>,
    %23 = vector.extract_strided_slice %4 {offsets = [1, 0, 0], sizes = [1, 8, 512], strides = [1, 1, 1]} : vector<2x8x512xf32> to vector<1x8x512xf32>
    %24 = vector.shape_cast %23 : vector<1x8x512xf32> to vector<8x512xf32>
    %25 = vector.extract_strided_slice %24 {offsets = [0, 0], sizes = [8, 384], strides = [1, 1]} : vector<8x512xf32> to vector<8x384xf32>
    %26 = vector.extract_strided_slice %24 {offsets = [0, 2], sizes = [8, 384], strides = [1, 1]} : vector<8x512xf32> to vector<8x384xf32>
    %27 = vector.extract_strided_slice %24 {offsets = [0, 4], sizes = [8, 384], strides = [1, 1]} : vector<8x512xf32> to vector<8x384xf32>
    %28 = vector.extract_strided_slice %24 {offsets = [0, 40], sizes = [8, 384], strides = [1, 1]} : vector<8x512xf32> to vector<8x384xf32>
    %29 = vector.extract_strided_slice %24 {offsets = [0, 42], sizes = [8, 384], strides = [1, 1]} : vector<8x512xf32> to vector<8x384xf32>
    %30 = vector.extract_strided_slice %24 {offsets = [0, 44], sizes = [8, 384], strides = [1, 1]} : vector<8x512xf32> to vector<8x384xf32>
    %31 = vector.extract_strided_slice %24 {offsets = [0, 80], sizes = [8, 384], strides = [1, 1]} : vector<8x512xf32> to vector<8x384xf32>
    %32 = vector.extract_strided_slice %24 {offsets = [0, 82], sizes = [8, 384], strides = [1, 1]} : vector<8x512xf32> to vector<8x384xf32>
    %33 = vector.extract_strided_slice %24 {offsets = [0, 84], sizes = [8, 384], strides = [1, 1]} : vector<8x512xf32> to vector<8x384xf32>
    %34 = tpu.concatenate %25, %26, %27, %28, %29, %30, %31, %32, %33 in 0 : vector<8x384xf32>, vector<8x384xf32>, vector<8x384xf32>, vector<8x384xf32>, vector<8x384xf32>, vector<8x384xf32>, vector<8x384xf32>, vector<8x384xf32>, vector<8x384xf32> -> vector<72x384xf32>
    %cst_10 = arith.constant dense<0.000000e+00> : vector<16x384xf32>
    %35 = tpu.matmul %0, %34, %cst_10 {dimension_numbers = #tpu.dot_dimension_numbers<[1], [0], [0], [1], [0, 0, 1, 1], [], []>} : vector<16x72xf32>, vector<72x384xf32>, vector<16x384xf32> -> vector<16x384xf32>
    %36 = vector.broadcast %1 : vector<16x1xf32> to vector<16x384xf32>
    %37 = arith.addf %35, %36 : vector<16x384xf32>
    %c1 = arith.constant 1 : index
    %c0_11 = arith.constant 0 : index
    %c0_12 = arith.constant 0 : index
    %38 = vector.load %arg4[%c1, %c0_11, %c0_12] : memref<2x16x384xf32, #tpu.memory_space<vmem>>, vector<1x16x384xf32>
    %39 = vector.shape_cast %38 : vector<1x16x384xf32> to vector<16x384xf32>
    %40 = vector.shape_cast %37 : vector<16x384xf32> to vector<1x16x384xf32>
    tpu.vector_store %arg4[%c1, %c0_11, %c0_12], %40 {strides = array<i32>} : memref<2x16x384xf32, #tpu.memory_space<vmem>>, vector<1x16x384xf32>,
    return
  }
  func.func @transform_0(%arg0: i32) -> (i32, i32, i32) {
    %c0_i32 = arith.constant 0 : i32
    %c0_i32_0 = arith.constant 0 : i32
    %c0_i32_1 = arith.constant 0 : i32
    return %arg0, %c0_i32, %c0_i32_0 : i32, i32, i32
  }
  func.func @transform_1(%arg0: i32) -> (i32, i32) {
    %c0_i32 = arith.constant 0 : i32
    %c0_i32_0 = arith.constant 0 : i32
    %c0_i32_1 = arith.constant 0 : i32
    return %c0_i32, %c0_i32_0 : i32, i32
  }
  func.func @transform_2(%arg0: i32) -> (i32, i32) {
    %c0_i32 = arith.constant 0 : i32
    %c0_i32_0 = arith.constant 0 : i32
    %c0_i32_1 = arith.constant 0 : i32
    return %c0_i32, %c0_i32_0 : i32, i32
  }
  func.func @transform_3(%arg0: i32) -> (i32, i32, i32) {
    %c0_i32 = arith.constant 0 : i32
    %c0_i32_0 = arith.constant 0 : i32
    %c0_i32_1 = arith.constant 0 : i32
    return %arg0, %c0_i32, %c0_i32_0 : i32, i32, i32
  }
}

</mosaic_0001>

<llo_original>
// kernel: tpu_custom_call.1
$region0: #{tpu_custom_call.1}
  #allocation0 [shape = 'u32[]', space=smem, size = 0x4, offset = 0x4, fixed_abs, tag = 'smem constant byte address 0x4 - core index']
  #allocation1 [shape = 'u32[144,128]{1,0:T(1,128)}', space=vmem, size = 0x12000, scoped, tag = 'internal scratch']
  %s0 = inlined_call_operand.hbm [shape: f32[2,8,512], index: 0, kind: input, shape index: {}]
  %s1 = inlined_call_operand.vmem [shape: f32[16,72], index: 1, kind: input, shape index: {}]
  %s2 = inlined_call_operand.vmem [shape: f32[16,1], index: 2, kind: input, shape index: {}]
  %s3 = inlined_call_operand.hbm [shape: f32[2,16,384], index: 3, kind: output, shape index: {}]
  %s4 = sld [smem:[#allocation0]]
  $region26: #{tpu_custom_call.1} parent=0
    _
  %s6 = ssub.s32 1, %s4
  %s7 = scalar_select 0, %s6, %s4
  $region1: #{tpu_custom_call.1} parent=0
    #allocation2 [shape = 'u8[32768]{0}', space=vmem, size = 0x8000, scoped, tag = 'input window, operand 0, single buffered']
    #allocation3 [shape = 's32[1]{0}', space=sflag, size = 0x4, scoped, tag = 'scoped memory for tpu_custom_call.1']
    #allocation4 [shape = 's32[1]{0}', space=sflag, size = 0x4, scoped, tag = 'scoped memory for tpu_custom_call.1']
    #allocation5 [shape = 'u8[49152]{0}', space=vmem, size = 0xc000, scoped, tag = 'output window, operand 0, single buffered']
    %8 = vsyncpa [#allocation3], 0
    %9 = vsyncpa [#allocation4], 0
    // Predicated region
    $region2: #{tpu_custom_call.1} parent=1 // pred_check
      _
    $region3: #{tpu_custom_call.1} parent=1 // pred_check_branch
      %11 = sbr.rel (0) target = $region5
    $region4: #{tpu_custom_call.1} parent=1 // pred_region
      %s13 = ssub.s32 1024, 1024
      %14 = vsyncadd [#allocation3], %s13
      %s15 = sshll.u32 [#allocation2], 4
      %s16 = int_to_ptr.vmem [resolvable:$true] %s15
      %21 = dma.hbm_to_vmem [thread:$0]  %s0, 1024, %s16, [#allocation3], 512, 512, 32
    $region5: #{tpu_custom_call.1} parent=1 // pred_fallthru
      _
    // Predicated region
    $region6: #{tpu_custom_call.1} parent=1 // pred_check
      _
    $region7: #{tpu_custom_call.1} parent=1 // pred_check_branch
      %23 = sbr.rel (0) target = $region9
    $region8: #{tpu_custom_call.1} parent=1 // pred_region
      _
    $region9: #{tpu_custom_call.1} parent=1 // pred_fallthru
      _
    // Predicated region
    $region10: #{tpu_custom_call.1} parent=1 // pred_check
      _
    $region11: #{tpu_custom_call.1} parent=1 // pred_check_branch
      %25 = sbr.rel (0) target = $region13
    $region12: #{tpu_custom_call.1} parent=1 // pred_region
      _
    $region13: #{tpu_custom_call.1} parent=1 // pred_fallthru
      _
    // Predicated region
    $region14: #{tpu_custom_call.1} parent=1 // pred_check
      _
    $region15: #{tpu_custom_call.1} parent=1 // pred_check_branch
      %27 = sbr.rel (0) target = $region17
    $region16: #{tpu_custom_call.1} parent=1 // pred_region
      %28 = dma.done [#allocation3], 1024
    $region17: #{tpu_custom_call.1} parent=1 // pred_fallthru
      _
    %v29 = vld [vmem:[%s1] sm:$0xff]
    %v30 = vld [vmem:[%s1 + $0x8] sm:$0xff]
    %v31 = vld [vmem:[%s2] sm:$0xff]
    %v32 = vld [vmem:[%s2 + $0x8] sm:$0xff]
    %v33 = vld [vmem:[#allocation2] sm:$0xff]
    %v34 = vld [vmem:[#allocation2 + $0x8] sm:$0xff]
    %v35 = vld [vmem:[#allocation2 + $0x10] sm:$0xff]
    %v36 = vld [vmem:[#allocation2 + $0x18] sm:$0xff]
    %v37 = vld [vmem:[#allocation2 + $0x20] sm:$0xff]
    %v38 = vld [vmem:[#allocation2 + $0x28] sm:$0xff]
    %v39 = vld [vmem:[#allocation2 + $0x30] sm:$0xff]
    %v40 = vld [vmem:[#allocation2 + $0x38] sm:$0xff]
    %v41 = vmax.f32 %v33, 0.0
    %v42 = vmax.f32 %v34, 0.0
    %v43 = vmax.f32 %v35, 0.0
    %v44 = vmax.f32 %v36, 0.0
    %v45 = vmax.f32 %v37, 0.0
    %v46 = vmax.f32 %v38, 0.0
    %v47 = vmax.f32 %v39, 0.0
    %v48 = vmax.f32 %v40, 0.0
    %53 = vrot.lane.b32.xlu0 %v41, 126
    %v54 = vpop.permute.xlu0 %53
    %55 = vrot.lane.b32.xlu0 %v42, 126
    %v56 = vpop.permute.xlu0 %55
    %57 = vrot.lane.b32.xlu0 %v43, 126
    %v58 = vpop.permute.xlu0 %57
    %59 = vrot.lane.b32.xlu0 %v44, 126
    %v60 = vpop.permute.xlu0 %59
    %vm61 = vcmask 1031168
    %v62 = vsel %vm61, %v54, %v56
    %v63 = vsel %vm61, %v56, %v58
    %v64 = vsel %vm61, %v58, %v60
    %68 = vrot.lane.b32.xlu0 %v41, 124
    %v69 = vpop.permute.xlu0 %68
    %70 = vrot.lane.b32.xlu0 %v42, 124
    %v71 = vpop.permute.xlu0 %70
    %72 = vrot.lane.b32.xlu0 %v43, 124
    %v73 = vpop.permute.xlu0 %72
    %74 = vrot.lane.b32.xlu0 %v44, 124
    %v75 = vpop.permute.xlu0 %74
    %vm76 = vcmask 1014784
    %v77 = vsel %vm76, %v69, %v71
    %v78 = vsel %vm76, %v71, %v73
    %v79 = vsel %vm76, %v73, %v75
    %83 = vrot.lane.b32.xlu0 %v41, 88
    %v84 = vpop.permute.xlu0 %83
    %85 = vrot.lane.b32.xlu0 %v42, 88
    %v86 = vpop.permute.xlu0 %85
    %87 = vrot.lane.b32.xlu0 %v43, 88
    %v88 = vpop.permute.xlu0 %87
    %89 = vrot.lane.b32.xlu0 %v44, 88
    %v90 = vpop.permute.xlu0 %89
    %vm91 = vcmask 719872
    %v92 = vsel %vm91, %v84, %v86
    %v93 = vsel %vm91, %v86, %v88
    %v94 = vsel %vm91, %v88, %v90
    %98 = vrot.lane.b32.xlu0 %v41, 86
    %v99 = vpop.permute.xlu0 %98
    %100 = vrot.lane.b32.xlu0 %v42, 86
    %v101 = vpop.permute.xlu0 %100
    %102 = vrot.lane.b32.xlu0 %v43, 86
    %v103 = vpop.permute.xlu0 %102
    %104 = vrot.lane.b32.xlu0 %v44, 86
    %v105 = vpop.permute.xlu0 %104
    %vm106 = vcmask 703488
    %v107 = vsel %vm106, %v99, %v101
    %v108 = vsel %vm106, %v101, %v103
    %v109 = vsel %vm106, %v103, %v105
    %113 = vrot.lane.b32.xlu0 %v41, 84
    %v114 = vpop.permute.xlu0 %113
    %115 = vrot.lane.b32.xlu0 %v42, 84
    %v116 = vpop.permute.xlu0 %115
    %117 = vrot.lane.b32.xlu0 %v43, 84
    %v118 = vpop.permute.xlu0 %117
    %119 = vrot.lane.b32.xlu0 %v44, 84
    %v120 = vpop.permute.xlu0 %119
    %vm121 = vcmask 687104
    %v122 = vsel %vm121, %v114, %v116
    %v123 = vsel %vm121, %v116, %v118
    %v124 = vsel %vm121, %v118, %v120
    %128 = vrot.lane.b32.xlu0 %v41, 48
    %v129 = vpop.permute.xlu0 %128
    %130 = vrot.lane.b32.xlu0 %v42, 48
    %v131 = vpop.permute.xlu0 %130
    %132 = vrot.lane.b32.xlu0 %v43, 48
    %v133 = vpop.permute.xlu0 %132
    %134 = vrot.lane.b32.xlu0 %v44, 48
    %v135 = vpop.permute.xlu0 %134
    %vm136 = vcmask 392192
    %v137 = vsel %vm136, %v129, %v131
    %v138 = vsel %vm136, %v131, %v133
    %v139 = vsel %vm136, %v133, %v135
    %143 = vrot.lane.b32.xlu0 %v41, 46
    %v144 = vpop.permute.xlu0 %143
    %145 = vrot.lane.b32.xlu0 %v42, 46
    %v146 = vpop.permute.xlu0 %145
    %147 = vrot.lane.b32.xlu0 %v43, 46
    %v148 = vpop.permute.xlu0 %147
    %149 = vrot.lane.b32.xlu0 %v44, 46
    %v150 = vpop.permute.xlu0 %149
    %vm151 = vcmask 375808
    %v152 = vsel %vm151, %v144, %v146
    %v153 = vsel %vm151, %v146, %v148
    %v154 = vsel %vm151, %v148, %v150
    %158 = vrot.lane.b32.xlu0 %v41, 44
    %v159 = vpop.permute.xlu0 %158
    %160 = vrot.lane.b32.xlu0 %v42, 44
    %v161 = vpop.permute.xlu0 %160
    %162 = vrot.lane.b32.xlu0 %v43, 44
    %v163 = vpop.permute.xlu0 %162
    %164 = vrot.lane.b32.xlu0 %v44, 44
    %v165 = vpop.permute.xlu0 %164
    %vm166 = vcmask 359424
    %v167 = vsel %vm166, %v159, %v161
    %v168 = vsel %vm166, %v161, %v163
    %v169 = vsel %vm166, %v163, %v165
    %174 = vset.pattern.permute.xlu0 0
    %175 = vperm.xlu0 %174, %v31
    %v176 = vpop.permute.xlu0 %175
    %179 = vset.pattern.permute.xlu0 0
    %180 = vperm.xlu0 %179, %v32
    %v181 = vpop.permute.xlu0 %180
    %vm183 = vcmask 588800
    %v185 = vsel %vm183, %v29, 0
    %v188 = vsel %vm183, %v30, 0
    %190 = vmatprep.subr.mxu0 0.0
    %191 = vmatpush1.msra.mxu0 0.0
    %192 = vmatprep.subr.mxu0 0.0
    %193 = vmatpush1.msra.mxu0 0.0
    %194 = vmatprep.subr.mxu0 0.0
    %195 = vmatpush1.msra.mxu0 0.0
    %196 = vmatprep.subr.mxu0 0.0
    %197 = vmatpush1.msra.mxu0 0.0
    %198 = vmatprep.subr.mxu0 0.0
    %199 = vmatpush1.msra.mxu0 0.0
    %200 = vmatprep.subr.mxu0 0.0
    %201 = vmatpush1.msra.mxu0 0.0
    %202 = vmatprep.subr.mxu0 0.0
    %203 = vmatpush1.msra.mxu0 0.0
    %204 = vmatprep.subr.mxu0 %v168
    %205 = vmatpush1.msra.mxu0 %v167
    %206 = vmatprep.subr.mxu0 %v153
    %207 = vmatpush1.msra.mxu0 %v152
    %208 = vmatprep.subr.mxu0 %v138
    %209 = vmatpush1.msra.mxu0 %v137
    %210 = vmatprep.subr.mxu0 %v123
    %211 = vmatpush1.msra.mxu0 %v122
    %212 = vmatprep.subr.mxu0 %v108
    %213 = vmatpush1.msra.mxu0 %v107
    %214 = vmatprep.subr.mxu0 %v93
    %215 = vmatpush1.msra.mxu0 %v92
    %216 = vmatprep.subr.mxu0 %v78
    %217 = vmatpush1.msra.mxu0 %v77
    %218 = vmatprep.subr.mxu0 %v63
    %219 = vmatpush1.msra.mxu0 %v62
    %220 = vmatprep.subr.mxu0 %v42
    %221 = vmatpush1.msra.mxu0 %v41
    %222 = vmatprep.subr.mxu0 0.0
    %223 = vmatpush2.msra.mxu0 0.0
    %224 = vmatprep.subr.mxu0 0.0
    %225 = vmatpush2.msra.mxu0 0.0
    %226 = vmatprep.subr.mxu0 0.0
    %227 = vmatpush2.msra.mxu0 0.0
    %228 = vmatprep.subr.mxu0 0.0
    %229 = vmatpush2.msra.mxu0 0.0
    %230 = vmatprep.subr.mxu0 0.0
    %231 = vmatpush2.msra.mxu0 0.0
    %232 = vmatprep.subr.mxu0 0.0
    %233 = vmatpush2.msra.mxu0 0.0
    %234 = vmatprep.subr.mxu0 0.0
    %235 = vmatpush2.msra.mxu0 0.0
    %236 = vmatprep.subr.mxu0 0.0
    %237 = vmatpush2.msra.mxu0 0.0
    %238 = vmatprep.subr.mxu0 0.0
    %239 = vmatpush2.msra.mxu0 0.0
    %240 = vmatprep.subr.mxu0 0.0
    %241 = vmatpush2.msra.mxu0 0.0
    %242 = vmatprep.subr.mxu0 0.0
    %243 = vmatpush2.msra.mxu0 0.0
    %244 = vmatprep.subr.mxu0 0.0
    %245 = vmatpush2.msra.mxu0 0.0
    %246 = vmatprep.subr.mxu0 0.0
    %247 = vmatpush2.msra.mxu0 0.0
    %248 = vmatprep.subr.mxu0 0.0
    %249 = vmatpush2.msra.mxu0 0.0
    %250 = vmatprep.subr.mxu0 0.0
    %251 = vmatpush2.msra.mxu0 0.0
    %252 = vmatprep.subr.mxu0 0.0
    %253 = vmatpush2.msra.mxu0 0.0
    %254 = vmatprep.mubr.f32.mxu0 0.0
    %255 = vmatmul.mubr.f32.gmra.mxu0 %v185
    %v256 = vpop.f32.mrf.mxu0
    %v257 = vadd.f32 %v176, %v256
    %v258 = vpop.f32.mrf.mxu0
    %v259 = vadd.f32 %v176, %v258
    %260 = vmatprep.mubr.f32.mxu0 0.0
    %261 = vmatmul.mubr.f32.gmra.mxu0 %v188
    %v262 = vpop.f32.mrf.mxu0
    %v263 = vadd.f32 %v181, %v262
    %v264 = vpop.f32.mrf.mxu0
    %v265 = vadd.f32 %v181, %v264
    %266 = vdwg.mxu0
    %267 = vmatprep.subr.mxu0 0.0
    %268 = vmatpush1.msra.mxu0 0.0
    %269 = vmatprep.subr.mxu0 0.0
    %270 = vmatpush1.msra.mxu0 0.0
    %271 = vmatprep.subr.mxu0 0.0
    %272 = vmatpush1.msra.mxu0 0.0
    %273 = vmatprep.subr.mxu0 0.0
    %274 = vmatpush1.msra.mxu0 0.0
    %275 = vmatprep.subr.mxu0 0.0
    %276 = vmatpush1.msra.mxu0 0.0
    %277 = vmatprep.subr.mxu0 0.0
    %278 = vmatpush1.msra.mxu0 0.0
    %279 = vmatprep.subr.mxu0 0.0
    %280 = vmatpush1.msra.mxu0 0.0
    %281 = vmatprep.subr.mxu0 0.0
    %282 = vmatpush1.msra.mxu0 %v169
    %283 = vmatprep.subr.mxu0 0.0
    %284 = vmatpush1.msra.mxu0 %v154
    %285 = vmatprep.subr.mxu0 0.0
    %286 = vmatpush1.msra.mxu0 %v139
    %287 = vmatprep.subr.mxu0 0.0
    %288 = vmatpush1.msra.mxu0 %v124
    %289 = vmatprep.subr.mxu0 0.0
    %290 = vmatpush1.msra.mxu0 %v109
    %291 = vmatprep.subr.mxu0 0.0
    %292 = vmatpush1.msra.mxu0 %v94
    %293 = vmatprep.subr.mxu0 0.0
    %294 = vmatpush1.msra.mxu0 %v79
    %295 = vmatprep.subr.mxu0 0.0
    %296 = vmatpush1.msra.mxu0 %v64
    %297 = vmatprep.subr.mxu0 0.0
    %298 = vmatpush1.msra.mxu0 %v43
    %299 = vmatprep.subr.mxu0 0.0
    %300 = vmatpush2.msra.mxu0 0.0
    %301 = vmatprep.subr.mxu0 0.0
    %302 = vmatpush2.msra.mxu0 0.0
    %303 = vmatprep.subr.mxu0 0.0
    %304 = vmatpush2.msra.mxu0 0.0
    %305 = vmatprep.subr.mxu0 0.0
    %306 = vmatpush2.msra.mxu0 0.0
    %307 = vmatprep.subr.mxu0 0.0
    %308 = vmatpush2.msra.mxu0 0.0
    %309 = vmatprep.subr.mxu0 0.0
    %310 = vmatpush2.msra.mxu0 0.0
    %311 = vmatprep.subr.mxu0 0.0
    %312 = vmatpush2.msra.mxu0 0.0
    %313 = vmatprep.subr.mxu0 0.0
    %314 = vmatpush2.msra.mxu0 0.0
    %315 = vmatprep.subr.mxu0 0.0
    %316 = vmatpush2.msra.mxu0 0.0
    %317 = vmatprep.subr.mxu0 0.0
    %318 = vmatpush2.msra.mxu0 0.0
    %319 = vmatprep.subr.mxu0 0.0
    %320 = vmatpush2.msra.mxu0 0.0
    %321 = vmatprep.subr.mxu0 0.0
    %322 = vmatpush2.msra.mxu0 0.0
    %323 = vmatprep.subr.mxu0 0.0
    %324 = vmatpush2.msra.mxu0 0.0
    %325 = vmatprep.subr.mxu0 0.0
    %326 = vmatpush2.msra.mxu0 0.0
    %327 = vmatprep.subr.mxu0 0.0
    %328 = vmatpush2.msra.mxu0 0.0
    %329 = vmatprep.subr.mxu0 0.0
    %330 = vmatpush2.msra.mxu0 0.0
    %331 = vmatprep.mubr.f32.mxu0 0.0
    %332 = vmatmul.mubr.f32.gmra.mxu0 %v185
    %v333 = vpop.f32.mrf.mxu0
    %v334 = vadd.f32 %v176, %v333
    %v335 = vpop.f32.mrf.mxu0
    %336 = vmatprep.mubr.f32.mxu0 0.0
    %337 = vmatmul.mubr.f32.gmra.mxu0 %v188
    %v338 = vpop.f32.mrf.mxu0
    %v339 = vadd.f32 %v181, %v338
    %v340 = vpop.f32.mrf.mxu0
    %341 = vdwg.mxu0
    %342 = vst [vmem:[#allocation5] sm:$0xff] %v257
    %343 = vst [vmem:[#allocation5 + $0x8] sm:$0xff] %v259
    %344 = vst [vmem:[#allocation5 + $0x10] sm:$0xff] %v334
    %345 = vst [vmem:[#allocation5 + $0x18] sm:$0xff] %v263
    %346 = vst [vmem:[#allocation5 + $0x20] sm:$0xff] %v265
    %347 = vst [vmem:[#allocation5 + $0x28] sm:$0xff] %v339
    %352 = vrot.lane.b32.xlu0 %v45, 126
    %v353 = vpop.permute.xlu0 %352
    %354 = vrot.lane.b32.xlu0 %v46, 126
    %v355 = vpop.permute.xlu0 %354
    %356 = vrot.lane.b32.xlu0 %v47, 126
    %v357 = vpop.permute.xlu0 %356
    %358 = vrot.lane.b32.xlu0 %v48, 126
    %v359 = vpop.permute.xlu0 %358
    %v360 = vsel %vm61, %v353, %v355
    %v361 = vsel %vm61, %v355, %v357
    %v362 = vsel %vm61, %v357, %v359
    %366 = vrot.lane.b32.xlu0 %v45, 124
    %v367 = vpop.permute.xlu0 %366
    %368 = vrot.lane.b32.xlu0 %v46, 124
    %v369 = vpop.permute.xlu0 %368
    %370 = vrot.lane.b32.xlu0 %v47, 124
    %v371 = vpop.permute.xlu0 %370
    %372 = vrot.lane.b32.xlu0 %v48, 124
    %v373 = vpop.permute.xlu0 %372
    %v374 = vsel %vm76, %v367, %v369
    %v375 = vsel %vm76, %v369, %v371
    %v376 = vsel %vm76, %v371, %v373
    %380 = vrot.lane.b32.xlu0 %v45, 88
    %v381 = vpop.permute.xlu0 %380
    %382 = vrot.lane.b32.xlu0 %v46, 88
    %v383 = vpop.permute.xlu0 %382
    %384 = vrot.lane.b32.xlu0 %v47, 88
    %v385 = vpop.permute.xlu0 %384
    %386 = vrot.lane.b32.xlu0 %v48, 88
    %v387 = vpop.permute.xlu0 %386
    %v388 = vsel %vm91, %v381, %v383
    %v389 = vsel %vm91, %v383, %v385
    %v390 = vsel %vm91, %v385, %v387
    %394 = vrot.lane.b32.xlu0 %v45, 86
    %v395 = vpop.permute.xlu0 %394
    %396 = vrot.lane.b32.xlu0 %v46, 86
    %v397 = vpop.permute.xlu0 %396
    %398 = vrot.lane.b32.xlu0 %v47, 86
    %v399 = vpop.permute.xlu0 %398
    %400 = vrot.lane.b32.xlu0 %v48, 86
    %v401 = vpop.permute.xlu0 %400
    %v402 = vsel %vm106, %v395, %v397
    %v403 = vsel %vm106, %v397, %v399
    %v404 = vsel %vm106, %v399, %v401
    %408 = vrot.lane.b32.xlu0 %v45, 84
    %v409 = vpop.permute.xlu0 %408
    %410 = vrot.lane.b32.xlu0 %v46, 84
    %v411 = vpop.permute.xlu0 %410
    %412 = vrot.lane.b32.xlu0 %v47, 84
    %v413 = vpop.permute.xlu0 %412
    %414 = vrot.lane.b32.xlu0 %v48, 84
    %v415 = vpop.permute.xlu0 %414
    %v416 = vsel %vm121, %v409, %v411
    %v417 = vsel %vm121, %v411, %v413
    %v418 = vsel %vm121, %v413, %v415
    %422 = vrot.lane.b32.xlu0 %v45, 48
    %v423 = vpop.permute.xlu0 %422
    %424 = vrot.lane.b32.xlu0 %v46, 48
    %v425 = vpop.permute.xlu0 %424
    %426 = vrot.lane.b32.xlu0 %v47, 48
    %v427 = vpop.permute.xlu0 %426
    %428 = vrot.lane.b32.xlu0 %v48, 48
    %v429 = vpop.permute.xlu0 %428
    %v430 = vsel %vm136, %v423, %v425
    %v431 = vsel %vm136, %v425, %v427
    %v432 = vsel %vm136, %v427, %v429
    %436 = vrot.lane.b32.xlu0 %v45, 46
    %v437 = vpop.permute.xlu0 %436
    %438 = vrot.lane.b32.xlu0 %v46, 46
    %v439 = vpop.permute.xlu0 %438
    %440 = vrot.lane.b32.xlu0 %v47, 46
    %v441 = vpop.permute.xlu0 %440
    %442 = vrot.lane.b32.xlu0 %v48, 46
    %v443 = vpop.permute.xlu0 %442
    %v444 = vsel %vm151, %v437, %v439
    %v445 = vsel %vm151, %v439, %v441
    %v446 = vsel %vm151, %v441, %v443
    %450 = vrot.lane.b32.xlu0 %v45, 44
    %v451 = vpop.permute.xlu0 %450
    %452 = vrot.lane.b32.xlu0 %v46, 44
    %v453 = vpop.permute.xlu0 %452
    %454 = vrot.lane.b32.xlu0 %v47, 44
    %v455 = vpop.permute.xlu0 %454
    %456 = vrot.lane.b32.xlu0 %v48, 44
    %v457 = vpop.permute.xlu0 %456
    %v458 = vsel %vm166, %v451, %v453
    %v459 = vsel %vm166, %v453, %v455
    %v460 = vsel %vm166, %v455, %v457
    %464 = vmatprep.subr.mxu0 0.0
    %465 = vmatpush1.msra.mxu0 0.0
    %466 = vmatprep.subr.mxu0 0.0
    %467 = vmatpush1.msra.mxu0 0.0
    %468 = vmatprep.subr.mxu0 0.0
    %469 = vmatpush1.msra.mxu0 0.0
    %470 = vmatprep.subr.mxu0 0.0
    %471 = vmatpush1.msra.mxu0 0.0
    %472 = vmatprep.subr.mxu0 0.0
    %473 = vmatpush1.msra.mxu0 0.0
    %474 = vmatprep.subr.mxu0 0.0
    %475 = vmatpush1.msra.mxu0 0.0
    %476 = vmatprep.subr.mxu0 0.0
    %477 = vmatpush1.msra.mxu0 0.0
    %478 = vmatprep.subr.mxu0 %v459
    %479 = vmatpush1.msra.mxu0 %v458
    %480 = vmatprep.subr.mxu0 %v445
    %481 = vmatpush1.msra.mxu0 %v444
    %482 = vmatprep.subr.mxu0 %v431
    %483 = vmatpush1.msra.mxu0 %v430
    %484 = vmatprep.subr.mxu0 %v417
    %485 = vmatpush1.msra.mxu0 %v416
    %486 = vmatprep.subr.mxu0 %v403
    %487 = vmatpush1.msra.mxu0 %v402
    %488 = vmatprep.subr.mxu0 %v389
    %489 = vmatpush1.msra.mxu0 %v388
    %490 = vmatprep.subr.mxu0 %v375
    %491 = vmatpush1.msra.mxu0 %v374
    %492 = vmatprep.subr.mxu0 %v361
    %493 = vmatpush1.msra.mxu0 %v360
    %494 = vmatprep.subr.mxu0 %v46
    %495 = vmatpush1.msra.mxu0 %v45
    %496 = vmatprep.subr.mxu0 0.0
    %497 = vmatpush2.msra.mxu0 0.0
    %498 = vmatprep.subr.mxu0 0.0
    %499 = vmatpush2.msra.mxu0 0.0
    %500 = vmatprep.subr.mxu0 0.0
    %501 = vmatpush2.msra.mxu0 0.0
    %502 = vmatprep.subr.mxu0 0.0
    %503 = vmatpush2.msra.mxu0 0.0
    %504 = vmatprep.subr.mxu0 0.0
    %505 = vmatpush2.msra.mxu0 0.0
    %506 = vmatprep.subr.mxu0 0.0
    %507 = vmatpush2.msra.mxu0 0.0
    %508 = vmatprep.subr.mxu0 0.0
    %509 = vmatpush2.msra.mxu0 0.0
    %510 = vmatprep.subr.mxu0 0.0
    %511 = vmatpush2.msra.mxu0 0.0
    %512 = vmatprep.subr.mxu0 0.0
    %513 = vmatpush2.msra.mxu0 0.0
    %514 = vmatprep.subr.mxu0 0.0
    %515 = vmatpush2.msra.mxu0 0.0
    %516 = vmatprep.subr.mxu0 0.0
    %517 = vmatpush2.msra.mxu0 0.0
    %518 = vmatprep.subr.mxu0 0.0
    %519 = vmatpush2.msra.mxu0 0.0
    %520 = vmatprep.subr.mxu0 0.0
    %521 = vmatpush2.msra.mxu0 0.0
    %522 = vmatprep.subr.mxu0 0.0
    %523 = vmatpush2.msra.mxu0 0.0
    %524 = vmatprep.subr.mxu0 0.0
    %525 = vmatpush2.msra.mxu0 0.0
    %526 = vmatprep.subr.mxu0 0.0
    %527 = vmatpush2.msra.mxu0 0.0
    %528 = vmatprep.mubr.f32.mxu0 0.0
    %529 = vmatmul.mubr.f32.gmra.mxu0 %v185
    %v530 = vpop.f32.mrf.mxu0
    %v531 = vadd.f32 %v176, %v530
    %v532 = vpop.f32.mrf.mxu0
    %v533 = vadd.f32 %v176, %v532
    %534 = vmatprep.mubr.f32.mxu0 0.0
    %535 = vmatmul.mubr.f32.gmra.mxu0 %v188
    %v536 = vpop.f32.mrf.mxu0
    %v537 = vadd.f32 %v181, %v536
    %v538 = vpop.f32.mrf.mxu0
    %v539 = vadd.f32 %v181, %v538
    %540 = vdwg.mxu0
    %541 = vmatprep.subr.mxu0 0.0
    %542 = vmatpush1.msra.mxu0 0.0
    %543 = vmatprep.subr.mxu0 0.0
    %544 = vmatpush1.msra.mxu0 0.0
    %545 = vmatprep.subr.mxu0 0.0
    %546 = vmatpush1.msra.mxu0 0.0
    %547 = vmatprep.subr.mxu0 0.0
    %548 = vmatpush1.msra.mxu0 0.0
    %549 = vmatprep.subr.mxu0 0.0
    %550 = vmatpush1.msra.mxu0 0.0
    %551 = vmatprep.subr.mxu0 0.0
    %552 = vmatpush1.msra.mxu0 0.0
    %553 = vmatprep.subr.mxu0 0.0
    %554 = vmatpush1.msra.mxu0 0.0
    %555 = vmatprep.subr.mxu0 0.0
    %556 = vmatpush1.msra.mxu0 %v460
    %557 = vmatprep.subr.mxu0 0.0
    %558 = vmatpush1.msra.mxu0 %v446
    %559 = vmatprep.subr.mxu0 0.0
    %560 = vmatpush1.msra.mxu0 %v432
    %561 = vmatprep.subr.mxu0 0.0
    %562 = vmatpush1.msra.mxu0 %v418
    %563 = vmatprep.subr.mxu0 0.0
    %564 = vmatpush1.msra.mxu0 %v404
    %565 = vmatprep.subr.mxu0 0.0
    %566 = vmatpush1.msra.mxu0 %v390
    %567 = vmatprep.subr.mxu0 0.0
    %568 = vmatpush1.msra.mxu0 %v376
    %569 = vmatprep.subr.mxu0 0.0
    %570 = vmatpush1.msra.mxu0 %v362
    %571 = vmatprep.subr.mxu0 0.0
    %572 = vmatpush1.msra.mxu0 %v47
    %573 = vmatprep.subr.mxu0 0.0
    %574 = vmatpush2.msra.mxu0 0.0
    %575 = vmatprep.subr.mxu0 0.0
    %576 = vmatpush2.msra.mxu0 0.0
    %577 = vmatprep.subr.mxu0 0.0
    %578 = vmatpush2.msra.mxu0 0.0
    %579 = vmatprep.subr.mxu0 0.0
    %580 = vmatpush2.msra.mxu0 0.0
    %581 = vmatprep.subr.mxu0 0.0
    %582 = vmatpush2.msra.mxu0 0.0
    %583 = vmatprep.subr.mxu0 0.0
    %584 = vmatpush2.msra.mxu0 0.0
    %585 = vmatprep.subr.mxu0 0.0
    %586 = vmatpush2.msra.mxu0 0.0
    %587 = vmatprep.subr.mxu0 0.0
    %588 = vmatpush2.msra.mxu0 0.0
    %589 = vmatprep.subr.mxu0 0.0
    %590 = vmatpush2.msra.mxu0 0.0
    %591 = vmatprep.subr.mxu0 0.0
    %592 = vmatpush2.msra.mxu0 0.0
    %593 = vmatprep.subr.mxu0 0.0
    %594 = vmatpush2.msra.mxu0 0.0
    %595 = vmatprep.subr.mxu0 0.0
    %596 = vmatpush2.msra.mxu0 0.0
    %597 = vmatprep.subr.mxu0 0.0
    %598 = vmatpush2.msra.mxu0 0.0
    %599 = vmatprep.subr.mxu0 0.0
    %600 = vmatpush2.msra.mxu0 0.0
    %601 = vmatprep.subr.mxu0 0.0
    %602 = vmatpush2.msra.mxu0 0.0
    %603 = vmatprep.subr.mxu0 0.0
    %604 = vmatpush2.msra.mxu0 0.0
    %605 = vmatprep.mubr.f32.mxu0 0.0
    %606 = vmatmul.mubr.f32.gmra.mxu0 %v185
    %v607 = vpop.f32.mrf.mxu0
    %v608 = vadd.f32 %v176, %v607
    %v609 = vpop.f32.mrf.mxu0
    %610 = vmatprep.mubr.f32.mxu0 0.0
    %611 = vmatmul.mubr.f32.gmra.mxu0 %v188
    %v612 = vpop.f32.mrf.mxu0
    %v613 = vadd.f32 %v181, %v612
    %v614 = vpop.f32.mrf.mxu0
    %615 = vdwg.mxu0
    %s616 = scalar_lea.vmem [#allocation5], 48
    %617 = vst [vmem:[%s616] sm:$0xff] %v531
    %618 = vst [vmem:[%s616 + $0x8] sm:$0xff] %v533
    %619 = vst [vmem:[%s616 + $0x10] sm:$0xff] %v608
    %620 = vst [vmem:[%s616 + $0x18] sm:$0xff] %v537
    %621 = vst [vmem:[%s616 + $0x20] sm:$0xff] %v539
    %622 = vst [vmem:[%s616 + $0x28] sm:$0xff] %v613
    // Predicated region
    $region18: #{tpu_custom_call.1} parent=1 // pred_check
      _
    $region19: #{tpu_custom_call.1} parent=1 // pred_check_branch
      %624 = sbr.rel (0) target = $region21
    $region20: #{tpu_custom_call.1} parent=1 // pred_region
      %s626 = ssub.s32 1536, 1536
      %627 = vsyncadd [#allocation4], %s626
      %s628 = sshll.u32 [#allocation5], 4
      %s629 = int_to_ptr.vmem [resolvable:$true] %s628
      %634 = dma.vmem_to_hbm [thread:$0]  %s629, 1536, %s3, [#allocation4], 384, 384, 24
    $region21: #{tpu_custom_call.1} parent=1 // pred_fallthru
      _
    // Predicated region
    $region22: #{tpu_custom_call.1} parent=1 // pred_check
      _
    $region23: #{tpu_custom_call.1} parent=1 // pred_check_branch
      %636 = sbr.rel (0) target = $region25
    $region24: #{tpu_custom_call.1} parent=1 // pred_region
      %637 = dma.done [#allocation4], 1536
    $region25: #{tpu_custom_call.1} parent=1 // pred_fallthru
      _
    %638 = vsyncpa [#allocation3], 1
    %639 = vsyncpa [#allocation4], 1

</llo_original>
